<compile_context>
chip_gen: v7x
topology: tpu7x:2x2x1
jax: 0.10.0
libtpu: 0.0.40
codegen_flags: <defaults>
</compile_context>

<pallas_src>
import numpy as np
import jax
import jax.numpy as jnp
from jax.experimental import pallas as pl
from jax.experimental.pallas import tpu as pltpu

# ----------------------------- synthetic config ------------------------------
VOCAB_SIZE = 32
EMBED_SIZE = 32
HIDDEN_SIZE = 32
DEGREE_SIZE = 8
TZ = 8          # bspan (z) sequence length
TU = 8          # user-utterance (u) sequence length
B = 2           # batch

_VMEM = pl.BlockSpec(memory_space=pltpu.MemorySpace.VMEM)
_F32 = jnp.float32
_LANE = 128

# Packed weight-slab row layout (all offsets multiples of 8 sublanes).
_H, _E, _D, _V = HIDDEN_SIZE, EMBED_SIZE, DEGREE_SIZE, VOCAB_SIZE
_GRU_IN = _E + 2 * _H + _D                 # 104
R_WH = 0                                   # [H,128]  lanes: wh_z | wh_u
R_WHH = R_WH + _H                          # [H,128]  lanes: W_hh (3H = r|z|n)
R_WE = R_WHH + _H                          # [H,128]  lanes: we_z | we_u | wc2
R_WIH = R_WE + _H                          # [104,128] lanes: W_ih (3H = r|z|n)
R_WHEAD = R_WIH + _GRU_IN                  # [3H,128] lanes: proj weight (V)
R_BIAS = R_WHEAD + 3 * _H                  # [8,128]  bias rows
R_TOTAL = R_BIAS + 8                       # 304 rows


# ------------------------------ fused kernel ---------------------------------
def _decoder_kernel(slab_ref, act_ref, enc_ref, sparse_ref, proba_ref, gru_ref):
    H, E, D, V = _H, _E, _D, _V
    tz, tu = TZ, TU
    t_all = tz + tu
    nb = act_ref.shape[0]

    act = act_ref[...]                       # [B, H+E+D]
    hidden = act[:, 0:H]
    m_emb = act[:, H:H + E]
    degree = act[:, H + E:H + E + D]
    enc = enc_ref[...]                       # [B, Tz+Tu, H]
    sparse = sparse_ref[...]                 # [B, Tz, 128] (lanes >= V+Tz are 0)

    # ---- static carve-out of the packed weight slab (no runtime cost) --------
    bias = slab_ref[R_BIAS:R_BIAS + 8, :]    # [8,128]
    attn_bz, attn_bu = bias[0:1, 0:H], bias[0:1, H:2 * H]
    v_z, v_u = bias[1:2, 0:H], bias[1:2, H:2 * H]
    b_ih, b_hh = bias[2:3, 0:3 * H], bias[3:4, 0:3 * H]
    b_proj = bias[4:5, :]                    # valid lanes 0:V, zeros elsewhere
    b_c2 = bias[5:6, 0:H]

    # ---- fused dots -----------------------------------------------------------
    # hidden @ [wh_z | wh_u]  (2 attention hidden-projections in one MXU pass)
    hW = jnp.dot(hidden, slab_ref[R_WH:R_WH + H, :],
                 preferred_element_type=_F32)                          # [B,128]
    # enc_cat @ [we_z | we_u | wc2]  (2 attention enc-projections + copy2 in one)
    encW = jnp.dot(enc.reshape(nb * t_all, H), slab_ref[R_WE:R_WE + H, :],
                   preferred_element_type=_F32).reshape(nb, t_all, _LANE)

    z_enc = enc[:, :tz, :]
    u_enc = enc[:, tz:, :]

    # ---- attention: score_t = v . tanh(W_h h + W_e e_t + b); ctx = softmax.e ---
    def attn(eW, hWp, b, v, enc_slice):
        energy = jnp.tanh(eW + hWp[:, None, :] + b)                    # [B,T,H]
        scores = jnp.sum(energy * v, axis=-1, keepdims=True)           # [B,T,1]
        mx = jnp.max(scores, axis=1, keepdims=True)
        e = jnp.exp(scores - mx)
        inv = pl.reciprocal(jnp.sum(e, axis=1, keepdims=True), approx=True)
        return jnp.sum((e * inv) * enc_slice, axis=1)                  # [B,H]

    z_ctx = attn(encW[:, :tz, 0:H], hW[:, 0:H], attn_bz, v_z, z_enc)
    u_ctx = attn(encW[:, tz:, H:2 * H], hW[:, H:2 * H], attn_bu, v_u, u_enc)

    # ---- GRU cell (single step), gates r|z|n stacked on the lane axis ---------
    gru_in = jnp.concatenate([m_emb, u_ctx, z_ctx, degree], axis=-1)   # [B,104]
    gi = jnp.dot(gru_in, slab_ref[R_WIH:R_WIH + _GRU_IN, :],
                 preferred_element_type=_F32)[:, 0:3 * H] + b_ih       # [B,3H]
    gh = jnp.dot(hidden, slab_ref[R_WHH:R_WHH + H, :],
                 preferred_element_type=_F32)[:, 0:3 * H] + b_hh       # [B,3H]
    r = jax.nn.sigmoid(gi[:, 0:H] + gh[:, 0:H])
    zg = jax.nn.sigmoid(gi[:, H:2 * H] + gh[:, H:2 * H])
    n = jnp.tanh(gi[:, 2 * H:3 * H] + r * gh[:, 2 * H:3 * H])
    gru_out = (1.0 - zg) * n + zg * hidden                             # [B,H]
    gru_ref[...] = gru_out

    # ---- output head ----------------------------------------------------------
    lane = jax.lax.broadcasted_iota(jnp.int32, (nb, _LANE), 1)
    # gen_score = proj([z_ctx | u_ctx | gru_out]) on full 128 lanes; pad lanes
    # masked to -1e30 so they contribute exactly zero to the joint softmax.
    head_in = jnp.concatenate([z_ctx, u_ctx, gru_out], axis=-1)        # [B,3H]
    gen = jnp.dot(head_in, slab_ref[R_WHEAD:R_WHEAD + 3 * H, :],
                  preferred_element_type=_F32) + b_proj                # [B,128]
    gen = jnp.where(lane < V, gen, -1e30)

    # z_copy_score = tanh(proj_copy2(z_enc)) . gru_out -> log-sum-exp via sparse
    zcopy = jnp.tanh(encW[:, :tz, 2 * H:3 * H] + b_c2)                 # [B,Tz,H]
    zscore = jnp.sum(zcopy * gru_out[:, None, :], axis=-1, keepdims=True)  # [B,Tz,1]
    zmax = jnp.max(zscore, axis=1, keepdims=True)                      # [B,1,1]
    zexp = jnp.exp(zscore - zmax)
    copy_sum = jnp.sum(zexp * sparse, axis=1)                          # [B,128]
    valid = lane < (V + tz)
    copy_logits = jnp.where(
        valid, jnp.log(jnp.where(valid, copy_sum, 1.0)) + zmax[:, 0, :], -1e30)

    # joint softmax over [gen | copy] without materialising the concat.
    # Exact reciprocal for the FINAL distribution (must sum to 1).
    m = jnp.maximum(jnp.max(gen, axis=-1, keepdims=True),
                    jnp.max(copy_logits, axis=-1, keepdims=True))      # [B,1]
    eg = jnp.exp(gen - m)                                              # [B,128]
    ec = jnp.exp(copy_logits - m)                                      # [B,128]
    denom = (jnp.sum(eg, axis=-1, keepdims=True)
             + jnp.sum(ec, axis=-1, keepdims=True))
    inv = 1.0 / denom
    # proba = gen_p + copy_p[:, :V] in lanes [0,V), copy_p in [V,V+Tz), 0 after.
    proba_ref[...] = (eg + ec) * inv                                   # one dense store


def fused_decoder_step(slab, act, enc_cat, sparse_pad):
    nb = act.shape[0]
    cost = pl.CostEstimate(flops=420_000, transcendentals=2_600,
                           bytes_accessed=170_000)
    return pl.pallas_call(
        _decoder_kernel,
        out_shape=(jax.ShapeDtypeStruct((nb, _LANE), _F32),
                   jax.ShapeDtypeStruct((nb, HIDDEN_SIZE), _F32)),
        in_specs=[_VMEM] * 4,
        out_specs=(_VMEM, _VMEM),
        cost_estimate=cost,
    )(slab, act, enc_cat, sparse_pad)


# ----------------------------- parameters / glue ------------------------------
def pack_params(raw):
    """Pack every weight/bias into one [R_TOTAL, 128] f32 slab (one DMA)."""
    H, E, D, V = _H, _E, _D, _V
    az, au, g, p, c2 = raw["attn_z"], raw["attn_u"], raw["gru"], raw["proj"], raw["copy2"]
    slab = jnp.zeros((R_TOTAL, _LANE), _F32)
    slab = slab.at[R_WH:R_WH + H, 0:H].set(az["wh"])
    slab = slab.at[R_WH:R_WH + H, H:2 * H].set(au["wh"])
    slab = slab.at[R_WHH:R_WHH + H, 0:3 * H].set(g["whh"])
    slab = slab.at[R_WE:R_WE + H, 0:H].set(az["we"])
    slab = slab.at[R_WE:R_WE + H, H:2 * H].set(au["we"])
    slab = slab.at[R_WE:R_WE + H, 2 * H:3 * H].set(c2["w"])
    slab = slab.at[R_WIH:R_WIH + _GRU_IN, 0:3 * H].set(g["wih"])
    slab = slab.at[R_WHEAD:R_WHEAD + 3 * H, 0:V].set(p["w"])
    slab = slab.at[R_BIAS + 0, 0:H].set(az["b"])
    slab = slab.at[R_BIAS + 0, H:2 * H].set(au["b"])
    slab = slab.at[R_BIAS + 1, 0:H].set(az["v"])
    slab = slab.at[R_BIAS + 1, H:2 * H].set(au["v"])
    slab = slab.at[R_BIAS + 2, 0:3 * H].set(g["bih"])
    slab = slab.at[R_BIAS + 3, 0:3 * H].set(g["bhh"])
    slab = slab.at[R_BIAS + 4, 0:V].set(p["b"])
    slab = slab.at[R_BIAS + 5, 0:H].set(c2["b"])
    return slab


def init_params(key):
    H, E, D, V = _H, _E, _D, _V
    ks = iter(jax.random.split(key, 24))
    d = lambda shape, s=0.1: (s * jax.random.normal(next(ks), shape)).astype(_F32)
    raw = {
        "attn_z": {"wh": d((H, H)), "we": d((H, H)), "b": d((H,)), "v": d((H,))},
        "attn_u": {"wh": d((H, H)), "we": d((H, H)), "b": d((H,)), "v": d((H,))},
        # W_ih rows follow gru_in order [m_embed | u_ctx | z_ctx | degree];
        # columns are gates r|z|n (PyTorch GRU gate order).
        "gru": {"wih": d((_GRU_IN, 3 * H)), "whh": d((H, 3 * H)),
                "bih": d((3 * H,)), "bhh": d((3 * H,))},
        # proj rows follow head input order [z_ctx | u_ctx | gru_out].
        "proj": {"w": d((3 * H, V)), "b": d((V,))},
        "copy2": {"w": d((H, H)), "b": d((H,))},
    }
    return {"emb": d((V, E), 1.0), "slab": pack_params(raw)}


def get_sparse_selective_input(z_input_np, vocab_size):
    # host-side construction of the sparse selective-copy matrix (numpy glue)
    tz, nb = z_input_np.shape
    result = np.full((tz, nb, vocab_size + tz), 1e-10, dtype=np.float32)
    # TODO(synk): the requestable-slot branch (vocab.decode / '<word>_SLOT' encode)
    # needs a real vocab object; with a synthetic integer vocab only the
    # copy / in-vocab branches are reproduced.
    for t in range(tz - 1):
        for b in range(nb):
            w = int(z_input_np[t, b])
            if w == 2 or w >= vocab_size:
                result[t + 1, b, vocab_size + t] = 5.0
            else:
                result[t + 1, b, w] = 1.0
    return np.transpose(result, (1, 0, 2))   # [B, Tz, V+Tz]


@jax.jit
def response_decoder_forward(params, z_enc_out, u_enc_out, m_t_input,
                             degree_input, last_hidden, sparse_z_input):
    # z_enc_out: [Tz,B,H]  u_enc_out: [Tu,B,H]  m_t_input: [1,B] int
    # degree_input: [B,D]  last_hidden: [1,B,H]  sparse_z_input: [B,Tz,V+Tz]
    m_embed = params["emb"][m_t_input[0]]                  # [B, E]  gather glue
    hidden = last_hidden[0]                                # [B, H]
    act = jnp.concatenate([hidden, m_embed, degree_input], axis=-1)   # [B,H+E+D]
    z_b = jnp.transpose(z_enc_out, (1, 0, 2))              # [B, Tz, H] (one-time)
    u_b = jnp.transpose(u_enc_out, (1, 0, 2))              # [B, Tu, H]
    enc_cat = jnp.concatenate([z_b, u_b], axis=1)          # [B, Tz+Tu, H]
    tz = z_b.shape[1]
    pad = _LANE - (VOCAB_SIZE + tz)
    sparse_pad = jnp.pad(sparse_z_input.astype(_F32),
                         ((0, 0), (0, 0), (0, pad)))       # [B, Tz, 128]

    proba_pad, gru_out = fused_decoder_step(params["slab"], act, enc_cat,
                                            sparse_pad)
    proba = proba_pad[:, :VOCAB_SIZE + tz]                 # [B, V+Tz]
    new_hidden = gru_out[None]                             # [1, B, H]
    return proba, new_hidden, gru_out[None]


# ----------------------------------- main -------------------------------------
if __name__ == "__main__":
    key = jax.random.PRNGKey(0)
    kp, kz, ku, km, kd, kh, kzin = jax.random.split(key, 7)

    params = init_params(kp)
    z_enc_out = jax.random.normal(kz, (TZ, B, HIDDEN_SIZE), _F32)
    u_enc_out = jax.random.normal(ku, (TU, B, HIDDEN_SIZE), _F32)
    m_t_input = jax.random.randint(km, (1, B), 0, VOCAB_SIZE)
    degree_input = jax.random.uniform(kd, (B, DEGREE_SIZE), _F32)
    last_hidden = jax.random.normal(kh, (1, B, HIDDEN_SIZE), _F32)
    z_input_np = np.asarray(jax.random.randint(kzin, (TZ, B), 0, VOCAB_SIZE + 4))
    sparse_z = jnp.asarray(get_sparse_selective_input(z_input_np, VOCAB_SIZE))

    proba, last_hidden_out, gru_out = response_decoder_forward(
        params, z_enc_out, u_enc_out, m_t_input, degree_input, last_hidden,
        sparse_z)
    jax.block_until_ready((proba, last_hidden_out, gru_out))

    assert proba.shape == (B, VOCAB_SIZE + TZ)
    assert last_hidden_out.shape == (1, B, HIDDEN_SIZE)
    assert gru_out.shape == (1, B, HIDDEN_SIZE)
    assert bool(jnp.all(jnp.isfinite(proba)))
    assert bool(jnp.all(jnp.abs(jnp.sum(proba, axis=-1) - 1.0) < 1e-2))
    print("KERNEL_OK")
</pallas_src>

<mosaic_0001>
module attributes {stable_mosaic.version = 11 : i64} {
  func.func @_decoder_kernel(%arg0: memref<304x128xf32, #tpu.memory_space<vmem>>, %arg1: memref<2x72xf32, #tpu.memory_space<vmem>>, %arg2: memref<2x16x32xf32, #tpu.memory_space<vmem>>, %arg3: memref<2x8x128xf32, #tpu.memory_space<vmem>>, %arg4: memref<2x128xf32, #tpu.memory_space<vmem>>, %arg5: memref<2x32xf32, #tpu.memory_space<vmem>>) attributes {dimension_semantics = [], scalar_prefetch = 0 : i64, scratch_operands = 0 : i64, tpu.core_type = #tpu.core_type<tc>} {
    %c0 = arith.constant 0 : index
    %c0_0 = arith.constant 0 : index
    %0 = vector.load %arg1[%c0, %c0_0] : memref<2x72xf32, #tpu.memory_space<vmem>>, vector<2x72xf32>
    %1 = vector.extract_strided_slice %0 {offsets = [0, 0], sizes = [2, 32], strides = [1, 1]} : vector<2x72xf32> to vector<2x32xf32>
    %2 = vector.extract_strided_slice %0 {offsets = [0, 32], sizes = [2, 32], strides = [1, 1]} : vector<2x72xf32> to vector<2x32xf32>
    %3 = vector.extract_strided_slice %0 {offsets = [0, 64], sizes = [2, 8], strides = [1, 1]} : vector<2x72xf32> to vector<2x8xf32>
    %c0_1 = arith.constant 0 : index
    %c0_2 = arith.constant 0 : index
    %c0_3 = arith.constant 0 : index
    %4 = vector.load %arg2[%c0_1, %c0_2, %c0_3] : memref<2x16x32xf32, #tpu.memory_space<vmem>>, vector<2x16x32xf32>
    %c0_4 = arith.constant 0 : index
    %c0_5 = arith.constant 0 : index
    %c0_6 = arith.constant 0 : index
    %5 = vector.load %arg3[%c0_4, %c0_5, %c0_6] : memref<2x8x128xf32, #tpu.memory_space<vmem>>, vector<2x8x128xf32>
    %c296 = arith.constant 296 : index
    %c0_7 = arith.constant 0 : index
    %6 = vector.load %arg0[%c296, %c0_7] : memref<304x128xf32, #tpu.memory_space<vmem>>, vector<8x128xf32>
    %7 = vector.extract_strided_slice %6 {offsets = [0, 0], sizes = [1, 32], strides = [1, 1]} : vector<8x128xf32> to vector<1x32xf32>
    %8 = vector.extract_strided_slice %6 {offsets = [0, 32], sizes = [1, 32], strides = [1, 1]} : vector<8x128xf32> to vector<1x32xf32>
    %9 = vector.extract_strided_slice %6 {offsets = [1, 0], sizes = [1, 32], strides = [1, 1]} : vector<8x128xf32> to vector<1x32xf32>
    %10 = vector.extract_strided_slice %6 {offsets = [1, 32], sizes = [1, 32], strides = [1, 1]} : vector<8x128xf32> to vector<1x32xf32>
    %11 = vector.extract_strided_slice %6 {offsets = [2, 0], sizes = [1, 96], strides = [1, 1]} : vector<8x128xf32> to vector<1x96xf32>
    %12 = vector.extract_strided_slice %6 {offsets = [3, 0], sizes = [1, 96], strides = [1, 1]} : vector<8x128xf32> to vector<1x96xf32>
    %13 = vector.extract_strided_slice %6 {offsets = [4, 0], sizes = [1, 128], strides = [1, 1]} : vector<8x128xf32> to vector<1x128xf32>
    %14 = vector.extract_strided_slice %6 {offsets = [5, 0], sizes = [1, 32], strides = [1, 1]} : vector<8x128xf32> to vector<1x32xf32>
    %c0_8 = arith.constant 0 : index
    %c0_9 = arith.constant 0 : index
    %15 = vector.load %arg0[%c0_8, %c0_9] : memref<304x128xf32, #tpu.memory_space<vmem>>, vector<32x128xf32>
    %cst = arith.constant dense<0.000000e+00> : vector<2x128xf32>
    %16 = tpu.matmul %1, %15, %cst {dimension_numbers = #tpu.dot_dimension_numbers<[1], [0], [0], [1], [0, 0, 1, 1], [], []>} : vector<2x32xf32>, vector<32x128xf32>, vector<2x128xf32> -> vector<2x128xf32>
    %17 = vector.shape_cast %4 : vector<2x16x32xf32> to vector<32x32xf32>
    %c64 = arith.constant 64 : index
    %c0_10 = arith.constant 0 : index
    %18 = vector.load %arg0[%c64, %c0_10] : memref<304x128xf32, #tpu.memory_space<vmem>>, vector<32x128xf32>
    %cst_11 = arith.constant dense<0.000000e+00> : vector<32x128xf32>
    %19 = tpu.matmul %17, %18, %cst_11 {dimension_numbers = #tpu.dot_dimension_numbers<[1], [0], [0], [1], [0, 0, 1, 1], [], []>} : vector<32x32xf32>, vector<32x128xf32>, vector<32x128xf32> -> vector<32x128xf32>
    %20 = vector.shape_cast %19 : vector<32x128xf32> to vector<2x16x128xf32>
    %21 = vector.extract_strided_slice %4 {offsets = [0, 0, 0], sizes = [2, 8, 32], strides = [1, 1, 1]} : vector<2x16x32xf32> to vector<2x8x32xf32>
    %22 = vector.extract_strided_slice %4 {offsets = [0, 8, 0], sizes = [2, 8, 32], strides = [1, 1, 1]} : vector<2x16x32xf32> to vector<2x8x32xf32>
    %23 = vector.extract_strided_slice %20 {offsets = [0, 0, 0], sizes = [2, 8, 32], strides = [1, 1, 1]} : vector<2x16x128xf32> to vector<2x8x32xf32>
    %24 = vector.extract_strided_slice %16 {offsets = [0, 0], sizes = [2, 32], strides = [1, 1]} : vector<2x128xf32> to vector<2x32xf32>
    %25 = vector.shape_cast %24 : vector<2x32xf32> to vector<2x1x32xf32>
    %26 = vector.broadcast %25 : vector<2x1x32xf32> to vector<2x8x32xf32>
    %27 = arith.addf %23, %26 : vector<2x8x32xf32>
    %28 = vector.shape_cast %7 : vector<1x32xf32> to vector<1x1x32xf32>
    %29 = vector.broadcast %28 : vector<1x1x32xf32> to vector<2x8x32xf32>
    %30 = arith.addf %27, %29 : vector<2x8x32xf32>
    %31 = math.tanh %30 : vector<2x8x32xf32>
    %32 = vector.shape_cast %9 : vector<1x32xf32> to vector<1x1x32xf32>
    %33 = vector.broadcast %32 : vector<1x1x32xf32> to vector<2x8x32xf32>
    %34 = arith.mulf %31, %33 : vector<2x8x32xf32>
    %cst_12 = arith.constant dense<0.000000e+00> : vector<2x8xf32>
    %35 = vector.multi_reduction <add>, %34, %cst_12 [2] : vector<2x8x32xf32> to vector<2x8xf32>
    %36 = vector.shape_cast %35 : vector<2x8xf32> to vector<2x8x1xf32>
    %cst_13 = arith.constant dense<0xFF800000> : vector<2x1xf32>
    %37 = vector.multi_reduction <maximumf>, %36, %cst_13 [1] : vector<2x8x1xf32> to vector<2x1xf32>
    %38 = vector.shape_cast %37 : vector<2x1xf32> to vector<2x1x1xf32>
    %39 = vector.broadcast %38 : vector<2x1x1xf32> to vector<2x8x1xf32>
    %40 = arith.subf %36, %39 : vector<2x8x1xf32>
    %41 = math.exp %40 : vector<2x8x1xf32>
    %cst_14 = arith.constant dense<0.000000e+00> : vector<2x1xf32>
    %42 = vector.multi_reduction <add>, %41, %cst_14 [1] : vector<2x8x1xf32> to vector<2x1xf32>
    %43 = vector.shape_cast %42 : vector<2x1xf32> to vector<2x1x1xf32>
    %44 = tpu.reciprocal %43 {approx = true} : vector<2x1x1xf32> -> vector<2x1x1xf32>
    %45 = vector.broadcast %44 : vector<2x1x1xf32> to vector<2x8x1xf32>
    %46 = arith.mulf %41, %45 : vector<2x8x1xf32>
    %47 = vector.broadcast %46 : vector<2x8x1xf32> to vector<2x8x32xf32>
    %48 = arith.mulf %47, %21 : vector<2x8x32xf32>
    %cst_15 = arith.constant dense<0.000000e+00> : vector<2x32xf32>
    %49 = vector.multi_reduction <add>, %48, %cst_15 [1] : vector<2x8x32xf32> to vector<2x32xf32>
    %50 = vector.extract_strided_slice %20 {offsets = [0, 8, 32], sizes = [2, 8, 32], strides = [1, 1, 1]} : vector<2x16x128xf32> to vector<2x8x32xf32>
    %51 = vector.extract_strided_slice %16 {offsets = [0, 32], sizes = [2, 32], strides = [1, 1]} : vector<2x128xf32> to vector<2x32xf32>
    %52 = vector.shape_cast %51 : vector<2x32xf32> to vector<2x1x32xf32>
    %53 = vector.broadcast %52 : vector<2x1x32xf32> to vector<2x8x32xf32>
    %54 = arith.addf %50, %53 : vector<2x8x32xf32>
    %55 = vector.shape_cast %8 : vector<1x32xf32> to vector<1x1x32xf32>
    %56 = vector.broadcast %55 : vector<1x1x32xf32> to vector<2x8x32xf32>
    %57 = arith.addf %54, %56 : vector<2x8x32xf32>
    %58 = math.tanh %57 : vector<2x8x32xf32>
    %59 = vector.shape_cast %10 : vector<1x32xf32> to vector<1x1x32xf32>
    %60 = vector.broadcast %59 : vector<1x1x32xf32> to vector<2x8x32xf32>
    %61 = arith.mulf %58, %60 : vector<2x8x32xf32>
    %cst_16 = arith.constant dense<0.000000e+00> : vector<2x8xf32>
    %62 = vector.multi_reduction <add>, %61, %cst_16 [2] : vector<2x8x32xf32> to vector<2x8xf32>
    %63 = vector.shape_cast %62 : vector<2x8xf32> to vector<2x8x1xf32>
    %cst_17 = arith.constant dense<0xFF800000> : vector<2x1xf32>
    %64 = vector.multi_reduction <maximumf>, %63, %cst_17 [1] : vector<2x8x1xf32> to vector<2x1xf32>
    %65 = vector.shape_cast %64 : vector<2x1xf32> to vector<2x1x1xf32>
    %66 = vector.broadcast %65 : vector<2x1x1xf32> to vector<2x8x1xf32>
    %67 = arith.subf %63, %66 : vector<2x8x1xf32>
    %68 = math.exp %67 : vector<2x8x1xf32>
    %cst_18 = arith.constant dense<0.000000e+00> : vector<2x1xf32>
    %69 = vector.multi_reduction <add>, %68, %cst_18 [1] : vector<2x8x1xf32> to vector<2x1xf32>
    %70 = vector.shape_cast %69 : vector<2x1xf32> to vector<2x1x1xf32>
    %71 = tpu.reciprocal %70 {approx = true} : vector<2x1x1xf32> -> vector<2x1x1xf32>
    %72 = vector.broadcast %71 : vector<2x1x1xf32> to vector<2x8x1xf32>
    %73 = arith.mulf %68, %72 : vector<2x8x1xf32>
    %74 = vector.broadcast %73 : vector<2x8x1xf32> to vector<2x8x32xf32>
    %75 = arith.mulf %74, %22 : vector<2x8x32xf32>
    %cst_19 = arith.constant dense<0.000000e+00> : vector<2x32xf32>
    %76 = vector.multi_reduction <add>, %75, %cst_19 [1] : vector<2x8x32xf32> to vector<2x32xf32>
    %77 = tpu.concatenate %2, %76, %49, %3 in 1 : vector<2x32xf32>, vector<2x32xf32>, vector<2x32xf32>, vector<2x8xf32> -> vector<2x104xf32>
    %c96 = arith.constant 96 : index
    %c0_20 = arith.constant 0 : index
    %78 = vector.load %arg0[%c96, %c0_20] : memref<304x128xf32, #tpu.memory_space<vmem>>, vector<104x128xf32>
    %cst_21 = arith.constant dense<0.000000e+00> : vector<2x128xf32>
    %79 = tpu.matmul %77, %78, %cst_21 {dimension_numbers = #tpu.dot_dimension_numbers<[1], [0], [0], [1], [0, 0, 1, 1], [], []>} : vector<2x104xf32>, vector<104x128xf32>, vector<2x128xf32> -> vector<2x128xf32>
    %80 = vector.extract_strided_slice %79 {offsets = [0, 0], sizes = [2, 96], strides = [1, 1]} : vector<2x128xf32> to vector<2x96xf32>
    %81 = vector.broadcast %11 : vector<1x96xf32> to vector<2x96xf32>
    %82 = arith.addf %80, %81 : vector<2x96xf32>
    %c32 = arith.constant 32 : index
    %c0_22 = arith.constant 0 : index
    %83 = vector.load %arg0[%c32, %c0_22] : memref<304x128xf32, #tpu.memory_space<vmem>>, vector<32x128xf32>
    %cst_23 = arith.constant dense<0.000000e+00> : vector<2x128xf32>
    %84 = tpu.matmul %1, %83, %cst_23 {dimension_numbers = #tpu.dot_dimension_numbers<[1], [0], [0], [1], [0, 0, 1, 1], [], []>} : vector<2x32xf32>, vector<32x128xf32>, vector<2x128xf32> -> vector<2x128xf32>
    %85 = vector.extract_strided_slice %84 {offsets = [0, 0], sizes = [2, 96], strides = [1, 1]} : vector<2x128xf32> to vector<2x96xf32>
    %86 = vector.broadcast %12 : vector<1x96xf32> to vector<2x96xf32>
    %87 = arith.addf %85, %86 : vector<2x96xf32>
    %88 = vector.extract_strided_slice %82 {offsets = [0, 0], sizes = [2, 32], strides = [1, 1]} : vector<2x96xf32> to vector<2x32xf32>
    %89 = vector.extract_strided_slice %87 {offsets = [0, 0], sizes = [2, 32], strides = [1, 1]} : vector<2x96xf32> to vector<2x32xf32>
    %90 = arith.addf %88, %89 : vector<2x32xf32>
    %91 = arith.negf %90 : vector<2x32xf32>
    %92 = math.exp %91 : vector<2x32xf32>
    %cst_24 = arith.constant 1.000000e+00 : f32
    %93 = vector.broadcast %cst_24 : f32 to vector<2x32xf32>
    %94 = arith.addf %93, %92 : vector<2x32xf32>
    %95 = arith.divf %93, %94 : vector<2x32xf32>
    %96 = vector.extract_strided_slice %82 {offsets = [0, 32], sizes = [2, 32], strides = [1, 1]} : vector<2x96xf32> to vector<2x32xf32>
    %97 = vector.extract_strided_slice %87 {offsets = [0, 32], sizes = [2, 32], strides = [1, 1]} : vector<2x96xf32> to vector<2x32xf32>
    %98 = arith.addf %96, %97 : vector<2x32xf32>
    %99 = arith.negf %98 : vector<2x32xf32>
    %100 = math.exp %99 : vector<2x32xf32>
    %cst_25 = arith.constant 1.000000e+00 : f32
    %101 = vector.broadcast %cst_25 : f32 to vector<2x32xf32>
    %102 = arith.addf %101, %100 : vector<2x32xf32>
    %103 = arith.divf %101, %102 : vector<2x32xf32>
    %104 = vector.extract_strided_slice %82 {offsets = [0, 64], sizes = [2, 32], strides = [1, 1]} : vector<2x96xf32> to vector<2x32xf32>
    %105 = vector.extract_strided_slice %87 {offsets = [0, 64], sizes = [2, 32], strides = [1, 1]} : vector<2x96xf32> to vector<2x32xf32>
    %106 = arith.mulf %95, %105 : vector<2x32xf32>
    %107 = arith.addf %104, %106 : vector<2x32xf32>
    %108 = math.tanh %107 : vector<2x32xf32>
    %cst_26 = arith.constant 1.000000e+00 : f32
    %109 = vector.broadcast %cst_26 : f32 to vector<2x32xf32>
    %110 = arith.subf %109, %103 : vector<2x32xf32>
    %111 = arith.mulf %110, %108 : vector<2x32xf32>
    %112 = arith.mulf %103, %1 : vector<2x32xf32>
    %113 = arith.addf %111, %112 : vector<2x32xf32>
    %c0_27 = arith.constant 0 : index
    %c0_28 = arith.constant 0 : index
    %114 = vector.load %arg5[%c0_27, %c0_28] : memref<2x32xf32, #tpu.memory_space<vmem>>, vector<2x32xf32>
    tpu.vector_store %arg5[%c0_27, %c0_28], %113 {strides = array<i32>} : memref<2x32xf32, #tpu.memory_space<vmem>>, vector<2x32xf32>,
    %115 = tpu.iota {dimensions = array<i32: 1>} : vector<2x128xi32>
    %116 = tpu.concatenate %49, %76, %113 in 1 : vector<2x32xf32>, vector<2x32xf32>, vector<2x32xf32> -> vector<2x96xf32>
    %c200 = arith.constant 200 : index
    %c0_29 = arith.constant 0 : index
    %117 = vector.load %arg0[%c200, %c0_29] : memref<304x128xf32, #tpu.memory_space<vmem>>, vector<96x128xf32>
    %cst_30 = arith.constant dense<0.000000e+00> : vector<2x128xf32>
    %118 = tpu.matmul %116, %117, %cst_30 {dimension_numbers = #tpu.dot_dimension_numbers<[1], [0], [0], [1], [0, 0, 1, 1], [], []>} : vector<2x96xf32>, vector<96x128xf32>, vector<2x128xf32> -> vector<2x128xf32>
    %119 = vector.broadcast %13 : vector<1x128xf32> to vector<2x128xf32>
    %120 = arith.addf %118, %119 : vector<2x128xf32>
    %c32_i32 = arith.constant 32 : i32
    %121 = vector.broadcast %c32_i32 : i32 to vector<2x128xi32>
    %122 = arith.cmpi slt, %115, %121 : vector<2x128xi32>
    %cst_31 = arith.constant -1.000000e+30 : f32
    %123 = vector.broadcast %cst_31 : f32 to vector<2x128xf32>
    %124 = arith.select %122, %120, %123 : vector<2x128xi1>, vector<2x128xf32>
    %125 = vector.extract_strided_slice %20 {offsets = [0, 0, 64], sizes = [2, 8, 32], strides = [1, 1, 1]} : vector<2x16x128xf32> to vector<2x8x32xf32>
    %126 = vector.shape_cast %14 : vector<1x32xf32> to vector<1x1x32xf32>
    %127 = vector.broadcast %126 : vector<1x1x32xf32> to vector<2x8x32xf32>
    %128 = arith.addf %125, %127 : vector<2x8x32xf32>
    %129 = math.tanh %128 : vector<2x8x32xf32>
    %130 = vector.shape_cast %113 : vector<2x32xf32> to vector<2x1x32xf32>
    %131 = vector.broadcast %130 : vector<2x1x32xf32> to vector<2x8x32xf32>
    %132 = arith.mulf %129, %131 : vector<2x8x32xf32>
    %cst_32 = arith.constant dense<0.000000e+00> : vector<2x8xf32>
    %133 = vector.multi_reduction <add>, %132, %cst_32 [2] : vector<2x8x32xf32> to vector<2x8xf32>
    %134 = vector.shape_cast %133 : vector<2x8xf32> to vector<2x8x1xf32>
    %cst_33 = arith.constant dense<0xFF800000> : vector<2x1xf32>
    %135 = vector.multi_reduction <maximumf>, %134, %cst_33 [1] : vector<2x8x1xf32> to vector<2x1xf32>
    %136 = vector.shape_cast %135 : vector<2x1xf32> to vector<2x1x1xf32>
    %137 = vector.broadcast %136 : vector<2x1x1xf32> to vector<2x8x1xf32>
    %138 = arith.subf %134, %137 : vector<2x8x1xf32>
    %139 = math.exp %138 : vector<2x8x1xf32>
    %140 = vector.broadcast %139 : vector<2x8x1xf32> to vector<2x8x128xf32>
    %141 = arith.mulf %140, %5 : vector<2x8x128xf32>
    %cst_34 = arith.constant dense<0.000000e+00> : vector<2x128xf32>
    %142 = vector.multi_reduction <add>, %141, %cst_34 [1] : vector<2x8x128xf32> to vector<2x128xf32>
    %c40_i32 = arith.constant 40 : i32
    %143 = vector.broadcast %c40_i32 : i32 to vector<2x128xi32>
    %144 = arith.cmpi slt, %115, %143 : vector<2x128xi32>
    %cst_35 = arith.constant 1.000000e+00 : f32
    %145 = vector.broadcast %cst_35 : f32 to vector<2x128xf32>
    %146 = arith.select %144, %142, %145 : vector<2x128xi1>, vector<2x128xf32>
    %147 = math.log %146 : vector<2x128xf32>
    %148 = vector.shape_cast %136 : vector<2x1x1xf32> to vector<2x1xf32>
    %149 = vector.broadcast %148 : vector<2x1xf32> to vector<2x128xf32>
    %150 = arith.addf %147, %149 : vector<2x128xf32>
    %cst_36 = arith.constant -1.000000e+30 : f32
    %151 = vector.broadcast %cst_36 : f32 to vector<2x128xf32>
    %152 = arith.select %144, %150, %151 : vector<2x128xi1>, vector<2x128xf32>
    %cst_37 = arith.constant dense<0xFF800000> : vector<2xf32>
    %153 = vector.multi_reduction <maximumf>, %124, %cst_37 [1] : vector<2x128xf32> to vector<2xf32>
    %154 = vector.shape_cast %153 : vector<2xf32> to vector<2x1xf32>
    %cst_38 = arith.constant dense<0xFF800000> : vector<2xf32>
    %155 = vector.multi_reduction <maximumf>, %152, %cst_38 [1] : vector<2x128xf32> to vector<2xf32>
    %156 = vector.shape_cast %155 : vector<2xf32> to vector<2x1xf32>
    %157 = arith.maximumf %154, %156 : vector<2x1xf32>
    %158 = vector.broadcast %157 : vector<2x1xf32> to vector<2x128xf32>
    %159 = arith.subf %124, %158 : vector<2x128xf32>
    %160 = math.exp %159 : vector<2x128xf32>
    %161 = vector.broadcast %157 : vector<2x1xf32> to vector<2x128xf32>
    %162 = arith.subf %152, %161 : vector<2x128xf32>
    %163 = math.exp %162 : vector<2x128xf32>
    %cst_39 = arith.constant dense<0.000000e+00> : vector<2xf32>
    %164 = vector.multi_reduction <add>, %160, %cst_39 [1] : vector<2x128xf32> to vector<2xf32>
    %165 = vector.shape_cast %164 : vector<2xf32> to vector<2x1xf32>
    %cst_40 = arith.constant dense<0.000000e+00> : vector<2xf32>
    %166 = vector.multi_reduction <add>, %163, %cst_40 [1] : vector<2x128xf32> to vector<2xf32>
    %167 = vector.shape_cast %166 : vector<2xf32> to vector<2x1xf32>
    %168 = arith.addf %165, %167 : vector<2x1xf32>
    %cst_41 = arith.constant 1.000000e+00 : f32
    %169 = vector.broadcast %cst_41 : f32 to vector<2x1xf32>
    %170 = arith.divf %169, %168 : vector<2x1xf32>
    %171 = arith.addf %160, %163 : vector<2x128xf32>
    %172 = vector.broadcast %170 : vector<2x1xf32> to vector<2x128xf32>
    %173 = arith.mulf %171, %172 : vector<2x128xf32>
    %c0_42 = arith.constant 0 : index
    %c0_43 = arith.constant 0 : index
    %174 = vector.load %arg4[%c0_42, %c0_43] : memref<2x128xf32, #tpu.memory_space<vmem>>, vector<2x128xf32>
    tpu.vector_store %arg4[%c0_42, %c0_43], %173 {strides = array<i32>} : memref<2x128xf32, #tpu.memory_space<vmem>>, vector<2x128xf32>,
    return
  }
}

</mosaic_0001>

<llo_original>
// kernel: response_decoder_forward.1
$region0: #{response_decoder_forward.1}
  #allocation0 [shape = 'u32[]', space=smem, size = 0x4, offset = 0x4, fixed_abs, tag = 'smem constant byte address 0x4 - core index']
  #allocation1 [shape = 'u32[144,128]{1,0:T(1,128)}', space=vmem, size = 0x12000, scoped, tag = 'internal scratch']
  %s0 = inlined_call_operand.hbm [shape: f32[304,128], index: 0, kind: input, shape index: {}]
  %s1 = inlined_call_operand.vmem [shape: f32[2,72], index: 1, kind: input, shape index: {}]
  %s2 = inlined_call_operand.vmem [shape: f32[2,16,32], index: 2, kind: input, shape index: {}]
  %s3 = inlined_call_operand.vmem [shape: f32[2,8,128], index: 3, kind: input, shape index: {}]
  %s4 = inlined_call_operand.hbm [shape: f32[2,128], index: 4, kind: output, shape index: {0}]
  %s5 = inlined_call_operand.vmem [shape: f32[2,32], index: 5, kind: output, shape index: {1}]
  %6 = xla_tuple %s4, %s5
  %s7 = sld [smem:[#allocation0]]
  $region38: #{response_decoder_forward.1} parent=0
    _
  %s9 = ssub.s32 1, %s7
  %s10 = scalar_select 0, %s9, %s7
  $region1: #{response_decoder_forward.1} parent=0
    #allocation2 [shape = 'u8[155648]{0}', space=vmem, size = 0x26000, scoped, tag = 'input window, operand 0, single buffered']
    #allocation3 [shape = 's32[1]{0}', space=sflag, size = 0x4, scoped, tag = 'scoped memory for response_decoder_forward.1']
    #allocation4 [shape = 's32[1]{0}', space=sflag, size = 0x4, scoped, tag = 'scoped memory for response_decoder_forward.1']
    #allocation5 [shape = 'u8[1024]{0}', space=vmem, size = 0x400, scoped, tag = 'output window, operand 0, single buffered']
    %11 = vsyncpa [#allocation3], 0
    %12 = vsyncpa [#allocation4], 0
    // Predicated region
    $region2: #{response_decoder_forward.1} parent=1 // pred_check
      _
    $region3: #{response_decoder_forward.1} parent=1 // pred_check_branch
      %14 = sbr.rel (0) target = $region5
    $region4: #{response_decoder_forward.1} parent=1 // pred_region
      %s16 = ssub.s32 4864, 4864
      %17 = vsyncadd [#allocation3], %s16
      %s18 = sshll.u32 [#allocation2], 4
      %s19 = int_to_ptr.vmem [resolvable:$true] %s18
      %24 = dma.hbm_to_vmem [thread:$0]  %s0, 4864, %s19, [#allocation3], 128, 128, 8
    $region5: #{response_decoder_forward.1} parent=1 // pred_fallthru
      _
    // Predicated region
    $region6: #{response_decoder_forward.1} parent=1 // pred_check
      _
    $region7: #{response_decoder_forward.1} parent=1 // pred_check_branch
      %26 = sbr.rel (0) target = $region9
    $region8: #{response_decoder_forward.1} parent=1 // pred_region
      _
    $region9: #{response_decoder_forward.1} parent=1 // pred_fallthru
      _
    // Predicated region
    $region10: #{response_decoder_forward.1} parent=1 // pred_check
      _
    $region11: #{response_decoder_forward.1} parent=1 // pred_check_branch
      %28 = sbr.rel (0) target = $region13
    $region12: #{response_decoder_forward.1} parent=1 // pred_region
      _
    $region13: #{response_decoder_forward.1} parent=1 // pred_fallthru
      _
    // Predicated region
    $region14: #{response_decoder_forward.1} parent=1 // pred_check
      _
    $region15: #{response_decoder_forward.1} parent=1 // pred_check_branch
      %30 = sbr.rel (0) target = $region17
    $region16: #{response_decoder_forward.1} parent=1 // pred_region
      _
    $region17: #{response_decoder_forward.1} parent=1 // pred_fallthru
      _
    // Predicated region
    $region18: #{response_decoder_forward.1} parent=1 // pred_check
      _
    $region19: #{response_decoder_forward.1} parent=1 // pred_check_branch
      %32 = sbr.rel (0) target = $region21
    $region20: #{response_decoder_forward.1} parent=1 // pred_region
      %33 = dma.done [#allocation3], 4864
    $region21: #{response_decoder_forward.1} parent=1 // pred_fallthru
      _
    %v34 = vld [vmem:[%s1] sm:$0x3]
    %v35 = vld [vmem:[%s2] sm:$0xff]
    %v36 = vld [vmem:[%s2 + $0x8] sm:$0xff]
    %v37 = vld [vmem:[%s2 + $0x10] sm:$0xff]
    %v38 = vld [vmem:[%s2 + $0x18] sm:$0xff]
    %v39 = vld [vmem:[%s3] sm:$0xff]
    %v40 = vld [vmem:[%s3 + $0x8] sm:$0xff]
    %v41 = vld [vmem:[#allocation2 + $0x128] sm:$0xff]
    %v42 = vld [vmem:[#allocation2] sm:$0xff]
    %v43 = vld [vmem:[#allocation2 + $0x8] sm:$0xff]
    %v44 = vld [vmem:[#allocation2 + $0x10] sm:$0xff]
    %v45 = vld [vmem:[#allocation2 + $0x18] sm:$0xff]
    %vm46 = vcmask 261120
    %v48 = vsel %vm46, %v34, 0
    %50 = vmatprep.subr.mxu0 0.0
    %51 = vmatpush1.msra.mxu0 %v42
    %52 = vmatprep.subr.mxu0 0.0
    %53 = vmatpush1.msra.mxu0 %v43
    %54 = vmatprep.subr.mxu0 0.0
    %55 = vmatpush1.msra.mxu0 %v44
    %56 = vmatprep.subr.mxu0 0.0
    %57 = vmatpush1.msra.mxu0 %v45
    %58 = vmatprep.subr.mxu0 0.0
    %59 = vmatpush1.msra.mxu0 0.0
    %60 = vmatprep.subr.mxu0 0.0
    %61 = vmatpush1.msra.mxu0 0.0
    %62 = vmatprep.subr.mxu0 0.0
    %63 = vmatpush1.msra.mxu0 0.0
    %64 = vmatprep.subr.mxu0 0.0
    %65 = vmatpush1.msra.mxu0 0.0
    %66 = vmatprep.subr.mxu0 0.0
    %67 = vmatpush1.msra.mxu0 0.0
    %68 = vmatprep.subr.mxu0 0.0
    %69 = vmatpush1.msra.mxu0 0.0
    %70 = vmatprep.subr.mxu0 0.0
    %71 = vmatpush1.msra.mxu0 0.0
    %72 = vmatprep.subr.mxu0 0.0
    %73 = vmatpush1.msra.mxu0 0.0
    %74 = vmatprep.subr.mxu0 0.0
    %75 = vmatpush1.msra.mxu0 0.0
    %76 = vmatprep.subr.mxu0 0.0
    %77 = vmatpush1.msra.mxu0 0.0
    %78 = vmatprep.subr.mxu0 0.0
    %79 = vmatpush1.msra.mxu0 0.0
    %80 = vmatprep.subr.mxu0 0.0
    %81 = vmatpush1.msra.mxu0 0.0
    %82 = vmatprep.subr.mxu0 0.0
    %83 = vmatpush1.msra.mxu0 0.0
    %84 = vmatprep.subr.mxu0 0.0
    %85 = vmatpush1.msra.mxu0 0.0
    %86 = vmatprep.subr.mxu0 0.0
    %87 = vmatpush1.msra.mxu0 0.0
    %88 = vmatprep.subr.mxu0 0.0
    %89 = vmatpush1.msra.mxu0 0.0
    %90 = vmatprep.subr.mxu0 0.0
    %91 = vmatpush1.msra.mxu0 0.0
    %92 = vmatprep.subr.mxu0 0.0
    %93 = vmatpush1.msra.mxu0 0.0
    %94 = vmatprep.subr.mxu0 0.0
    %95 = vmatpush1.msra.mxu0 0.0
    %96 = vmatprep.subr.mxu0 0.0
    %97 = vmatpush1.msra.mxu0 0.0
    %98 = vmatprep.subr.mxu0 0.0
    %99 = vmatpush1.msra.mxu0 0.0
    %100 = vmatprep.subr.mxu0 0.0
    %101 = vmatpush1.msra.mxu0 0.0
    %102 = vmatprep.subr.mxu0 0.0
    %103 = vmatpush1.msra.mxu0 0.0
    %104 = vmatprep.subr.mxu0 0.0
    %105 = vmatpush1.msra.mxu0 0.0
    %106 = vmatprep.subr.mxu0 0.0
    %107 = vmatpush1.msra.mxu0 0.0
    %108 = vmatprep.subr.mxu0 0.0
    %109 = vmatpush1.msra.mxu0 0.0
    %110 = vmatprep.subr.mxu0 0.0
    %111 = vmatpush1.msra.mxu0 0.0
    %112 = vmatprep.subr.mxu0 0.0
    %113 = vmatpush1.msra.mxu0 0.0
    %114 = vmatprep.mubr.f32.mxu0 0.0
    %115 = vmatmul.mubr.f32.gmra.mrb[0].mxu0 %v48
    %v116 = vpop.f32.mrb[0].mxu0
    %v117 = vadd.f32 0.0, %v116
    %v118 = vpop.f32.mrb[0].mxu0
    %119 = vdwg.mxu0
    %v120 = vld [vmem:[#allocation2 + $0x40] sm:$0xff]
    %v121 = vld [vmem:[#allocation2 + $0x48] sm:$0xff]
    %v122 = vld [vmem:[#allocation2 + $0x50] sm:$0xff]
    %v123 = vld [vmem:[#allocation2 + $0x58] sm:$0xff]
    %v125 = vsel %vm46, %v35, 0
    %v128 = vsel %vm46, %v36, 0
    %v131 = vsel %vm46, %v37, 0
    %v134 = vsel %vm46, %v38, 0
    %136 = vmatprep.subr.mxu0 0.0
    %137 = vmatpush1.msra.mxu0 %v120
    %138 = vmatprep.subr.mxu0 0.0
    %139 = vmatpush1.msra.mxu0 %v121
    %140 = vmatprep.subr.mxu0 0.0
    %141 = vmatpush1.msra.mxu0 %v122
    %142 = vmatprep.subr.mxu0 0.0
    %143 = vmatpush1.msra.mxu0 %v123
    %144 = vmatprep.subr.mxu0 0.0
    %145 = vmatpush1.msra.mxu0 0.0
    %146 = vmatprep.subr.mxu0 0.0
    %147 = vmatpush1.msra.mxu0 0.0
    %148 = vmatprep.subr.mxu0 0.0
    %149 = vmatpush1.msra.mxu0 0.0
    %150 = vmatprep.subr.mxu0 0.0
    %151 = vmatpush1.msra.mxu0 0.0
    %152 = vmatprep.subr.mxu0 0.0
    %153 = vmatpush1.msra.mxu0 0.0
    %154 = vmatprep.subr.mxu0 0.0
    %155 = vmatpush1.msra.mxu0 0.0
    %156 = vmatprep.subr.mxu0 0.0
    %157 = vmatpush1.msra.mxu0 0.0
    %158 = vmatprep.subr.mxu0 0.0
    %159 = vmatpush1.msra.mxu0 0.0
    %160 = vmatprep.subr.mxu0 0.0
    %161 = vmatpush1.msra.mxu0 0.0
    %162 = vmatprep.subr.mxu0 0.0
    %163 = vmatpush1.msra.mxu0 0.0
    %164 = vmatprep.subr.mxu0 0.0
    %165 = vmatpush1.msra.mxu0 0.0
    %166 = vmatprep.subr.mxu0 0.0
    %167 = vmatpush1.msra.mxu0 0.0
    %168 = vmatprep.subr.mxu0 0.0
    %169 = vmatpush1.msra.mxu0 0.0
    %170 = vmatprep.subr.mxu0 0.0
    %171 = vmatpush1.msra.mxu0 0.0
    %172 = vmatprep.subr.mxu0 0.0
    %173 = vmatpush1.msra.mxu0 0.0
    %174 = vmatprep.subr.mxu0 0.0
    %175 = vmatpush1.msra.mxu0 0.0
    %176 = vmatprep.subr.mxu0 0.0
    %177 = vmatpush1.msra.mxu0 0.0
    %178 = vmatprep.subr.mxu0 0.0
    %179 = vmatpush1.msra.mxu0 0.0
    %180 = vmatprep.subr.mxu0 0.0
    %181 = vmatpush1.msra.mxu0 0.0
    %182 = vmatprep.subr.mxu0 0.0
    %183 = vmatpush1.msra.mxu0 0.0
    %184 = vmatprep.subr.mxu0 0.0
    %185 = vmatpush1.msra.mxu0 0.0
    %186 = vmatprep.subr.mxu0 0.0
    %187 = vmatpush1.msra.mxu0 0.0
    %188 = vmatprep.subr.mxu0 0.0
    %189 = vmatpush1.msra.mxu0 0.0
    %190 = vmatprep.subr.mxu0 0.0
    %191 = vmatpush1.msra.mxu0 0.0
    %192 = vmatprep.subr.mxu0 0.0
    %193 = vmatpush1.msra.mxu0 0.0
    %194 = vmatprep.subr.mxu0 0.0
    %195 = vmatpush1.msra.mxu0 0.0
    %196 = vmatprep.subr.mxu0 0.0
    %197 = vmatpush1.msra.mxu0 0.0
    %198 = vmatprep.subr.mxu0 0.0
    %199 = vmatpush1.msra.mxu0 0.0
    %200 = vmatprep.mubr.f32.mxu0 0.0
    %201 = vmatmul.mubr.f32.gmra.mrb[0].mxu0 %v125
    %v202 = vpop.f32.mrb[0].mxu0
    %v203 = vadd.f32 0.0, %v202
    %v204 = vpop.f32.mrb[0].mxu0
    %205 = vmatprep.mubr.f32.mxu0 0.0
    %206 = vmatmul.mubr.f32.gmra.mrb[0].mxu0 %v128
    %v207 = vpop.f32.mrb[0].mxu0
    %v208 = vadd.f32 0.0, %v207
    %v209 = vpop.f32.mrb[0].mxu0
    %210 = vmatprep.mubr.f32.mxu0 0.0
    %211 = vmatmul.mubr.f32.gmra.mrb[0].mxu0 %v131
    %v212 = vpop.f32.mrb[0].mxu0
    %v213 = vadd.f32 0.0, %v212
    %v214 = vpop.f32.mrb[0].mxu0
    %215 = vmatprep.mubr.f32.mxu0 0.0
    %216 = vmatmul.mubr.f32.gmra.mrb[0].mxu0 %v134
    %v217 = vpop.f32.mrb[0].mxu0
    %v218 = vadd.f32 0.0, %v217
    %v219 = vpop.f32.mrb[0].mxu0
    %220 = vdwg.mxu0
    %v223 = vunpack.c.l.s4 1966171168
    %v224 = vunpack.c.0.s8 %v223
    %v225 = vlaneseq
    %v226 = vshrl.u32 %v225, 7
    %v227 = vsub.s32 %v224, %v226
    %v228 = vrot.slane %v117, %v227
    %v229 = vcombine.high %v228, %v228
    %v231 = vunpack.c.l.s4 1966171168
    %v232 = vunpack.c.0.s8 %v231
    %v233 = vlaneseq
    %v234 = vshrl.u32 %v233, 7
    %v235 = vsub.s32 %v232, %v234
    %v236 = vrot.slane %v228, %v235
    %v238 = vunpack.c.l.s4 1966171168
    %v239 = vunpack.c.0.s8 %v238
    %v240 = vlaneseq
    %v241 = vshrl.u32 %v240, 7
    %v242 = vsub.s32 %v239, %v241
    %v243 = vrot.slane %v229, %v242
    %v244 = vlaneseq
    %v245 = vshrl.u32 %v244, 7
    %v246 = vsub.s32 0, %v245
    %v247 = vrot.slane %v236, %v246
    %v248 = vlaneseq
    %v249 = vshrl.u32 %v248, 7
    %v250 = vsub.s32 0, %v249
    %v251 = vrot.slane %v243, %v250
    %v254 = vadd.f32 %v203, %v247
    %v255 = vadd.f32 %v213, %v251
    %v256 = vlaneseq
    %v257 = vshrl.u32 %v256, 7
    %v258 = vsub.s32 0, %v257
    %v259 = vrot.slane %v41, %v258
    %v260 = vadd.f32 %v254, %v259
    %v261 = vadd.f32 %v255, %v259
    %v262 = vtanh.pop %v260
    %v263 = vtanh.pop %v261
    %v264 = vlaneseq
    %v265 = vshrl.u32 %v264, 7
    %v266 = vsub.s32 1, %v265
    %v267 = vrot.slane %v41, %v266
    %v268 = vmul.f32 %v262, %v267
    %v269 = vmul.f32 %v263, %v267
    %v270 = vsel %vm46, %v268, 0.0
    %271 = vadd.xlane.f32.xlu0 %v270
    %v272 = vpop.xlane.xlu0 %271
    %v273 = vsel %vm46, %v269, 0.0
    %274 = vadd.xlane.f32.xlu0 %v273
    %v275 = vpop.xlane.xlu0 %274
    %v276 = vrot.slane %v272, 4
    %v277 = vmax.f32 %v272, %v276
    %v278 = vrot.slane %v277, 2
    %v279 = vmax.f32 %v277, %v278
    %v280 = vrot.slane %v279, 1
    %v281 = vmax.f32 %v279, %v280
    %v282 = vrot.slane %v275, 4
    %v283 = vmax.f32 %v275, %v282
    %v284 = vrot.slane %v283, 2
    %v285 = vmax.f32 %v283, %v284
    %v286 = vrot.slane %v285, 1
    %v287 = vmax.f32 %v285, %v286
    %v288 = vsub.f32 %v272, %v281
    %v289 = vsub.f32 %v275, %v287
    %v290 = vmul.f32 %v288, 1.442695
    %v291 = vpow.pop %v290
    %v292 = vmul.f32 %v289, 1.442695
    %v293 = vpow.pop %v292
    %v294 = vrot.slane %v291, 4
    %v295 = vadd.f32 %v291, %v294
    %v296 = vrot.slane %v295, 2
    %v297 = vadd.f32 %v295, %v296
    %v298 = vrot.slane %v297, 1
    %v299 = vadd.f32 %v297, %v298
    %v300 = vrot.slane %v293, 4
    %v301 = vadd.f32 %v293, %v300
    %v302 = vrot.slane %v301, 2
    %v303 = vadd.f32 %v301, %v302
    %v304 = vrot.slane %v303, 1
    %v305 = vadd.f32 %v303, %v304
    %v306 = vrcp.pop %v299
    %v307 = vrcp.pop %v305
    %v308 = vmul.f32 %v291, %v306
    %v309 = vmul.f32 %v293, %v307
    %v310 = vmul.f32 %v308, %v35
    %v311 = vmul.f32 %v309, %v37
    %v312 = vsel %vm46, %v310, 0.0
    %v313 = vrot.slane %v312, 4
    %v314 = vadd.f32 %v312, %v313
    %v315 = vrot.slane %v314, 2
    %v316 = vadd.f32 %v314, %v315
    %v317 = vrot.slane %v316, 1
    %v318 = vadd.f32 %v316, %v317
    %v319 = vsel %vm46, %v311, 0.0
    %v320 = vrot.slane %v319, 4
    %v321 = vadd.f32 %v319, %v320
    %v322 = vrot.slane %v321, 2
    %v323 = vadd.f32 %v321, %v322
    %v324 = vrot.slane %v323, 1
    %v325 = vadd.f32 %v323, %v324
    %v326 = vadd.f32 %v208, %v247
    %v327 = vadd.f32 %v218, %v251
    %v328 = vadd.f32 %v326, %v259
    %v329 = vadd.f32 %v327, %v259
    %v330 = vtanh.pop %v328
    %v331 = vtanh.pop %v329
    %v332 = vmul.f32 %v330, %v267
    %v333 = vmul.f32 %v331, %v267
    %336 = vrot.lane.b32.xlu0 %v332, 96
    %v337 = vpop.permute.xlu0 %336
    %338 = vrot.lane.b32.xlu0 %v333, 96
    %v339 = vpop.permute.xlu0 %338
    %v342 = vsel %vm46, %v337, 0.0
    %343 = vadd.xlane.f32.xlu0 %v342
    %v344 = vpop.xlane.xlu0 %343
    %v345 = vsel %vm46, %v339, 0.0
    %346 = vadd.xlane.f32.xlu0 %v345
    %v347 = vpop.xlane.xlu0 %346
    %v348 = vrot.slane %v344, 4
    %v349 = vmax.f32 %v344, %v348
    %v350 = vrot.slane %v349, 2
    %v351 = vmax.f32 %v349, %v350
    %v352 = vrot.slane %v351, 1
    %v353 = vmax.f32 %v351, %v352
    %v354 = vrot.slane %v347, 4
    %v355 = vmax.f32 %v347, %v354
    %v356 = vrot.slane %v355, 2
    %v357 = vmax.f32 %v355, %v356
    %v358 = vrot.slane %v357, 1
    %v359 = vmax.f32 %v357, %v358
    %v360 = vsub.f32 %v344, %v353
    %v361 = vsub.f32 %v347, %v359
    %v362 = vmul.f32 %v360, 1.442695
    %v363 = vpow.pop %v362
    %v364 = vmul.f32 %v361, 1.442695
    %v365 = vpow.pop %v364
    %v366 = vrot.slane %v363, 4
    %v367 = vadd.f32 %v363, %v366
    %v368 = vrot.slane %v367, 2
    %v369 = vadd.f32 %v367, %v368
    %v370 = vrot.slane %v369, 1
    %v371 = vadd.f32 %v369, %v370
    %v372 = vrot.slane %v365, 4
    %v373 = vadd.f32 %v365, %v372
    %v374 = vrot.slane %v373, 2
    %v375 = vadd.f32 %v373, %v374
    %v376 = vrot.slane %v375, 1
    %v377 = vadd.f32 %v375, %v376
    %v378 = vrcp.pop %v371
    %v379 = vrcp.pop %v377
    %v380 = vmul.f32 %v363, %v378
    %v381 = vmul.f32 %v365, %v379
    %v382 = vmul.f32 %v380, %v36
    %v383 = vmul.f32 %v381, %v38
    %v384 = vsel %vm46, %v382, 0.0
    %v385 = vrot.slane %v384, 4
    %v386 = vadd.f32 %v384, %v385
    %v387 = vrot.slane %v386, 2
    %v388 = vadd.f32 %v386, %v387
    %v389 = vrot.slane %v388, 1
    %v390 = vadd.f32 %v388, %v389
    %v391 = vsel %vm46, %v383, 0.0
    %v392 = vrot.slane %v391, 4
    %v393 = vadd.f32 %v391, %v392
    %v394 = vrot.slane %v393, 2
    %v395 = vadd.f32 %v393, %v394
    %v396 = vrot.slane %v395, 1
    %v397 = vadd.f32 %v395, %v396
    %398 = vrot.lane.b32.xlu0 %v34, 96
    %v399 = vpop.permute.xlu0 %398
    %vm403 = vcmask 1041409
    %v404 = vsel %vm403, %v397, %v390
    %405 = vrot.lane.b32.xlu0 %v404, 32
    %v406 = vpop.permute.xlu0 %405
    %v410 = vsel %vm403, %v325, %v318
    %411 = vrot.lane.b32.xlu0 %v410, 64
    %v412 = vpop.permute.xlu0 %411
    %414 = vrot.lane.b32.xlu0 %v34, 32
    %v415 = vpop.permute.xlu0 %414
    %v417 = vsel %vm46, %v399, %v406
    %vm418 = vcmask 523264
    %v419 = vsel %vm418, %v417, %v412
    %vm420 = vcmask 785408
    %v421 = vsel %vm420, %v419, %v415
    %v422 = vld [vmem:[#allocation2 + $0x60] sm:$0xff]
    %v423 = vld [vmem:[#allocation2 + $0x68] sm:$0xff]
    %v424 = vld [vmem:[#allocation2 + $0x70] sm:$0xff]
    %v425 = vld [vmem:[#allocation2 + $0x78] sm:$0xff]
    %v426 = vld [vmem:[#allocation2 + $0x80] sm:$0xff]
    %v427 = vld [vmem:[#allocation2 + $0x88] sm:$0xff]
    %v428 = vld [vmem:[#allocation2 + $0x90] sm:$0xff]
    %v429 = vld [vmem:[#allocation2 + $0x98] sm:$0xff]
    %v430 = vld [vmem:[#allocation2 + $0xa0] sm:$0xff]
    %v431 = vld [vmem:[#allocation2 + $0xa8] sm:$0xff]
    %v432 = vld [vmem:[#allocation2 + $0xb0] sm:$0xff]
    %v433 = vld [vmem:[#allocation2 + $0xb8] sm:$0xff]
    %v434 = vld [vmem:[#allocation2 + $0xc0] sm:$0xff]
    %vm435 = vcmask 850944
    %v437 = vsel %vm435, %v421, 0
    %439 = vmatprep.subr.mxu0 0.0
    %440 = vmatpush1.msra.mxu0 %v422
    %441 = vmatprep.subr.mxu0 0.0
    %442 = vmatpush1.msra.mxu0 %v423
    %443 = vmatprep.subr.mxu0 0.0
    %444 = vmatpush1.msra.mxu0 %v424
    %445 = vmatprep.subr.mxu0 0.0
    %446 = vmatpush1.msra.mxu0 %v425
    %447 = vmatprep.subr.mxu0 0.0
    %448 = vmatpush1.msra.mxu0 %v426
    %449 = vmatprep.subr.mxu0 0.0
    %450 = vmatpush1.msra.mxu0 %v427
    %451 = vmatprep.subr.mxu0 0.0
    %452 = vmatpush1.msra.mxu0 %v428
    %453 = vmatprep.subr.mxu0 0.0
    %454 = vmatpush1.msra.mxu0 %v429
    %455 = vmatprep.subr.mxu0 0.0
    %456 = vmatpush1.msra.mxu0 %v430
    %457 = vmatprep.subr.mxu0 0.0
    %458 = vmatpush1.msra.mxu0 %v431
    %459 = vmatprep.subr.mxu0 0.0
    %460 = vmatpush1.msra.mxu0 %v432
    %461 = vmatprep.subr.mxu0 0.0
    %462 = vmatpush1.msra.mxu0 %v433
    %463 = vmatprep.subr.mxu0 0.0
    %464 = vmatpush1.msra.mxu0 %v434
    %465 = vmatprep.subr.mxu0 0.0
    %466 = vmatpush1.msra.mxu0 0.0
    %467 = vmatprep.subr.mxu0 0.0
    %468 = vmatpush1.msra.mxu0 0.0
    %469 = vmatprep.subr.mxu0 0.0
    %470 = vmatpush1.msra.mxu0 0.0
    %471 = vmatprep.subr.mxu0 0.0
    %472 = vmatpush1.msra.mxu0 0.0
    %473 = vmatprep.subr.mxu0 0.0
    %474 = vmatpush1.msra.mxu0 0.0
    %475 = vmatprep.subr.mxu0 0.0
    %476 = vmatpush1.msra.mxu0 0.0
    %477 = vmatprep.subr.mxu0 0.0
    %478 = vmatpush1.msra.mxu0 0.0
    %479 = vmatprep.subr.mxu0 0.0
    %480 = vmatpush1.msra.mxu0 0.0
    %481 = vmatprep.subr.mxu0 0.0
    %482 = vmatpush1.msra.mxu0 0.0
    %483 = vmatprep.subr.mxu0 0.0
    %484 = vmatpush1.msra.mxu0 0.0
    %485 = vmatprep.subr.mxu0 0.0
    %486 = vmatpush1.msra.mxu0 0.0
    %487 = vmatprep.subr.mxu0 0.0
    %488 = vmatpush1.msra.mxu0 0.0
    %489 = vmatprep.subr.mxu0 0.0
    %490 = vmatpush1.msra.mxu0 0.0
    %491 = vmatprep.subr.mxu0 0.0
    %492 = vmatpush1.msra.mxu0 0.0
    %493 = vmatprep.subr.mxu0 0.0
    %494 = vmatpush1.msra.mxu0 0.0
    %495 = vmatprep.subr.mxu0 0.0
    %496 = vmatpush1.msra.mxu0 0.0
    %497 = vmatprep.subr.mxu0 0.0
    %498 = vmatpush1.msra.mxu0 0.0
    %499 = vmatprep.subr.mxu0 0.0
    %500 = vmatpush1.msra.mxu0 0.0
    %501 = vmatprep.subr.mxu0 0.0
    %502 = vmatpush1.msra.mxu0 0.0
    %503 = vmatprep.mubr.f32.mxu0 0.0
    %504 = vmatmul.mubr.f32.gmra.mrb[0].mxu0 %v437
    %v505 = vpop.f32.mrb[0].mxu0
    %v506 = vadd.f32 0.0, %v505
    %v507 = vpop.f32.mrb[0].mxu0
    %508 = vdwg.mxu0
    %v509 = vlaneseq
    %v510 = vshrl.u32 %v509, 7
    %v511 = vsub.s32 2, %v510
    %v512 = vrot.slane %v41, %v511
    %v513 = vadd.f32 %v506, %v512
    %v514 = vld [vmem:[#allocation2 + $0x20] sm:$0xff]
    %v515 = vld [vmem:[#allocation2 + $0x28] sm:$0xff]
    %v516 = vld [vmem:[#allocation2 + $0x30] sm:$0xff]
    %v517 = vld [vmem:[#allocation2 + $0x38] sm:$0xff]
    %518 = vmatprep.subr.mxu0 0.0
    %519 = vmatpush1.msra.mxu0 %v514
    %520 = vmatprep.subr.mxu0 0.0
    %521 = vmatpush1.msra.mxu0 %v515
    %522 = vmatprep.subr.mxu0 0.0
    %523 = vmatpush1.msra.mxu0 %v516
    %524 = vmatprep.subr.mxu0 0.0
    %525 = vmatpush1.msra.mxu0 %v517
    %526 = vmatprep.subr.mxu0 0.0
    %527 = vmatpush1.msra.mxu0 0.0
    %528 = vmatprep.subr.mxu0 0.0
    %529 = vmatpush1.msra.mxu0 0.0
    %530 = vmatprep.subr.mxu0 0.0
    %531 = vmatpush1.msra.mxu0 0.0
    %532 = vmatprep.subr.mxu0 0.0
    %533 = vmatpush1.msra.mxu0 0.0
    %534 = vmatprep.subr.mxu0 0.0
    %535 = vmatpush1.msra.mxu0 0.0
    %536 = vmatprep.subr.mxu0 0.0
    %537 = vmatpush1.msra.mxu0 0.0
    %538 = vmatprep.subr.mxu0 0.0
    %539 = vmatpush1.msra.mxu0 0.0
    %540 = vmatprep.subr.mxu0 0.0
    %541 = vmatpush1.msra.mxu0 0.0
    %542 = vmatprep.subr.mxu0 0.0
    %543 = vmatpush1.msra.mxu0 0.0
    %544 = vmatprep.subr.mxu0 0.0
    %545 = vmatpush1.msra.mxu0 0.0
    %546 = vmatprep.subr.mxu0 0.0
    %547 = vmatpush1.msra.mxu0 0.0
    %548 = vmatprep.subr.mxu0 0.0
    %549 = vmatpush1.msra.mxu0 0.0
    %550 = vmatprep.subr.mxu0 0.0
    %551 = vmatpush1.msra.mxu0 0.0
    %552 = vmatprep.subr.mxu0 0.0
    %553 = vmatpush1.msra.mxu0 0.0
    %554 = vmatprep.subr.mxu0 0.0
    %555 = vmatpush1.msra.mxu0 0.0
    %556 = vmatprep.subr.mxu0 0.0
    %557 = vmatpush1.msra.mxu0 0.0
    %558 = vmatprep.subr.mxu0 0.0
    %559 = vmatpush1.msra.mxu0 0.0
    %560 = vmatprep.subr.mxu0 0.0
    %561 = vmatpush1.msra.mxu0 0.0
    %562 = vmatprep.subr.mxu0 0.0
    %563 = vmatpush1.msra.mxu0 0.0
    %564 = vmatprep.subr.mxu0 0.0
    %565 = vmatpush1.msra.mxu0 0.0
    %566 = vmatprep.subr.mxu0 0.0
    %567 = vmatpush1.msra.mxu0 0.0
    %568 = vmatprep.subr.mxu0 0.0
    %569 = vmatpush1.msra.mxu0 0.0
    %570 = vmatprep.subr.mxu0 0.0
    %571 = vmatpush1.msra.mxu0 0.0
    %572 = vmatprep.subr.mxu0 0.0
    %573 = vmatpush1.msra.mxu0 0.0
    %574 = vmatprep.subr.mxu0 0.0
    %575 = vmatpush1.msra.mxu0 0.0
    %576 = vmatprep.subr.mxu0 0.0
    %577 = vmatpush1.msra.mxu0 0.0
    %578 = vmatprep.subr.mxu0 0.0
    %579 = vmatpush1.msra.mxu0 0.0
    %580 = vmatprep.subr.mxu0 0.0
    %581 = vmatpush1.msra.mxu0 0.0
    %582 = vmatprep.mubr.f32.mxu0 0.0
    %583 = vmatmul.mubr.f32.gmra.mrb[0].mxu0 %v48
    %v584 = vpop.f32.mrb[0].mxu0
    %v585 = vadd.f32 0.0, %v584
    %v586 = vpop.f32.mrb[0].mxu0
    %587 = vdwg.mxu0
    %v588 = vlaneseq
    %v589 = vshrl.u32 %v588, 7
    %v590 = vsub.s32 3, %v589
    %v591 = vrot.slane %v41, %v590
    %v592 = vadd.f32 %v585, %v591
    %v593 = vadd.f32 %v513, %v592
    %v594 = vxor.u32 %v593, 2147483648
    %v595 = vmul.f32 %v594, 1.442695
    %v596 = vpow.pop %v595
    %v597 = vadd.f32 %v596, 1.0
    %v598 = vrcp.pop %v597
    %v599 = vmul.f32 1.0, %v598
    %601 = vrot.lane.b32.xlu0 %v592, 64
    %v602 = vpop.permute.xlu0 %601
    %v604 = vmul.f32 %v599, %v602
    %606 = vrot.lane.b32.xlu0 %v604, 64
    %v607 = vpop.permute.xlu0 %606
    %v609 = vadd.f32 %v513, %v607
    %v610 = vtanh.pop %v609
    %v611 = vsub.f32 1.0, %v599
    %613 = vrot.lane.b32.xlu0 %v610, 96
    %v614 = vpop.permute.xlu0 %613
    %v616 = vmul.f32 %v611, %v614
    %v617 = vmul.f32 %v599, %v415
    %v618 = vadd.f32 %v616, %v617
    %620 = vrot.lane.b32.xlu0 %v618, 96
    %v621 = vpop.permute.xlu0 %620
    %vm623 = vcmask 254976
    %624 = vst.msk [vmem:[%s5] sm:$0x3] %vm623, %v621
    %v625 = vlaneseq
    %v626 = vand.u32 %v625, 127
    %628 = vrot.lane.b32.xlu0 %v618, 32
    %v629 = vpop.permute.xlu0 %628
    %v631 = vsel %vm46, %v410, %v406
    %v632 = vsel %vm418, %v631, %v629
    %v633 = vld [vmem:[#allocation2 + $0xc8] sm:$0xff]
    %v634 = vld [vmem:[#allocation2 + $0xd0] sm:$0xff]
    %v635 = vld [vmem:[#allocation2 + $0xd8] sm:$0xff]
    %v636 = vld [vmem:[#allocation2 + $0xe0] sm:$0xff]
    %v637 = vld [vmem:[#allocation2 + $0xe8] sm:$0xff]
    %v638 = vld [vmem:[#allocation2 + $0xf0] sm:$0xff]
    %v639 = vld [vmem:[#allocation2 + $0xf8] sm:$0xff]
    %v640 = vld [vmem:[#allocation2 + $0x100] sm:$0xff]
    %v641 = vld [vmem:[#allocation2 + $0x108] sm:$0xff]
    %v642 = vld [vmem:[#allocation2 + $0x110] sm:$0xff]
    %v643 = vld [vmem:[#allocation2 + $0x118] sm:$0xff]
    %v644 = vld [vmem:[#allocation2 + $0x120] sm:$0xff]
    %v645 = vlaneseq
    %v646 = vshrl.u32 %v645, 7
    %v647 = vsub.s32 4, %v646
    %v648 = vrot.slane %v41, %v647
    %v650 = vsel %vm420, %v632, 0
    %652 = vmatprep.subr.mxu0 0.0
    %653 = vmatpush1.msra.mxu0 %v633
    %654 = vmatprep.subr.mxu0 0.0
    %655 = vmatpush1.msra.mxu0 %v634
    %656 = vmatprep.subr.mxu0 0.0
    %657 = vmatpush1.msra.mxu0 %v635
    %658 = vmatprep.subr.mxu0 0.0
    %659 = vmatpush1.msra.mxu0 %v636
    %660 = vmatprep.subr.mxu0 0.0
    %661 = vmatpush1.msra.mxu0 %v637
    %662 = vmatprep.subr.mxu0 0.0
    %663 = vmatpush1.msra.mxu0 %v638
    %664 = vmatprep.subr.mxu0 0.0
    %665 = vmatpush1.msra.mxu0 %v639
    %666 = vmatprep.subr.mxu0 0.0
    %667 = vmatpush1.msra.mxu0 %v640
    %668 = vmatprep.subr.mxu0 0.0
    %669 = vmatpush1.msra.mxu0 %v641
    %670 = vmatprep.subr.mxu0 0.0
    %671 = vmatpush1.msra.mxu0 %v642
    %672 = vmatprep.subr.mxu0 0.0
    %673 = vmatpush1.msra.mxu0 %v643
    %674 = vmatprep.subr.mxu0 0.0
    %675 = vmatpush1.msra.mxu0 %v644
    %676 = vmatprep.subr.mxu0 0.0
    %677 = vmatpush1.msra.mxu0 0.0
    %678 = vmatprep.subr.mxu0 0.0
    %679 = vmatpush1.msra.mxu0 0.0
    %680 = vmatprep.subr.mxu0 0.0
    %681 = vmatpush1.msra.mxu0 0.0
    %682 = vmatprep.subr.mxu0 0.0
    %683 = vmatpush1.msra.mxu0 0.0
    %684 = vmatprep.subr.mxu0 0.0
    %685 = vmatpush1.msra.mxu0 0.0
    %686 = vmatprep.subr.mxu0 0.0
    %687 = vmatpush1.msra.mxu0 0.0
    %688 = vmatprep.subr.mxu0 0.0
    %689 = vmatpush1.msra.mxu0 0.0
    %690 = vmatprep.subr.mxu0 0.0
    %691 = vmatpush1.msra.mxu0 0.0
    %692 = vmatprep.subr.mxu0 0.0
    %693 = vmatpush1.msra.mxu0 0.0
    %694 = vmatprep.subr.mxu0 0.0
    %695 = vmatpush1.msra.mxu0 0.0
    %696 = vmatprep.subr.mxu0 0.0
    %697 = vmatpush1.msra.mxu0 0.0
    %698 = vmatprep.subr.mxu0 0.0
    %699 = vmatpush1.msra.mxu0 0.0
    %700 = vmatprep.subr.mxu0 0.0
    %701 = vmatpush1.msra.mxu0 0.0
    %702 = vmatprep.subr.mxu0 0.0
    %703 = vmatpush1.msra.mxu0 0.0
    %704 = vmatprep.subr.mxu0 0.0
    %705 = vmatpush1.msra.mxu0 0.0
    %706 = vmatprep.subr.mxu0 0.0
    %707 = vmatpush1.msra.mxu0 0.0
    %708 = vmatprep.subr.mxu0 0.0
    %709 = vmatpush1.msra.mxu0 0.0
    %710 = vmatprep.subr.mxu0 0.0
    %711 = vmatpush1.msra.mxu0 0.0
    %712 = vmatprep.subr.mxu0 0.0
    %713 = vmatpush1.msra.mxu0 0.0
    %714 = vmatprep.subr.mxu0 0.0
    %715 = vmatpush1.msra.mxu0 0.0
    %716 = vmatprep.mubr.f32.mxu0 0.0
    %717 = vmatmul.mubr.f32.gmra.mrb[0].mxu0 %v650
    %v718 = vpop.f32.mrb[0].mxu0
    %v719 = vadd.f32 %v648, %v718
    %v720 = vpop.f32.mrb[0].mxu0
    %721 = vdwg.mxu0
    %vm722 = vcmp.lt.s32.totalorder %v626, 32
    %v723 = vsel %vm722, %v719, -1e+30
    %v724 = vlaneseq
    %v725 = vshrl.u32 %v724, 7
    %v726 = vsub.s32 5, %v725
    %v727 = vrot.slane %v41, %v726
    %729 = vrot.lane.b32.xlu0 %v727, 64
    %v730 = vpop.permute.xlu0 %729
    %v732 = vadd.f32 %v203, %v730
    %v733 = vadd.f32 %v213, %v730
    %v734 = vtanh.pop %v732
    %v735 = vtanh.pop %v733
    %v737 = vunpack.c.l.s4 1966171168
    %v738 = vunpack.c.0.s8 %v737
    %v739 = vlaneseq
    %v740 = vshrl.u32 %v739, 7
    %v741 = vsub.s32 %v738, %v740
    %v742 = vrot.slane %v618, %v741
    %v743 = vcombine.high %v742, %v742
    %v745 = vunpack.c.l.s4 1966171168
    %v746 = vunpack.c.0.s8 %v745
    %v747 = vlaneseq
    %v748 = vshrl.u32 %v747, 7
    %v749 = vsub.s32 %v746, %v748
    %v750 = vrot.slane %v742, %v749
    %v752 = vunpack.c.l.s4 1966171168
    %v753 = vunpack.c.0.s8 %v752
    %v754 = vlaneseq
    %v755 = vshrl.u32 %v754, 7
    %v756 = vsub.s32 %v753, %v755
    %v757 = vrot.slane %v743, %v756
    %v758 = vlaneseq
    %v759 = vshrl.u32 %v758, 7
    %v760 = vsub.s32 0, %v759
    %v761 = vrot.slane %v750, %v760
    %v762 = vlaneseq
    %v763 = vshrl.u32 %v762, 7
    %v764 = vsub.s32 0, %v763
    %v765 = vrot.slane %v757, %v764
    %766 = vrot.lane.b32.xlu0 %v761, 32
    %v767 = vpop.permute.xlu0 %766
    %768 = vrot.lane.b32.xlu0 %v765, 32
    %v769 = vpop.permute.xlu0 %768
    %v772 = vmul.f32 %v734, %v767
    %v773 = vmul.f32 %v735, %v769
    %776 = vrot.lane.b32.xlu0 %v772, 64
    %v777 = vpop.permute.xlu0 %776
    %778 = vrot.lane.b32.xlu0 %v773, 64
    %v779 = vpop.permute.xlu0 %778
    %v782 = vsel %vm46, %v777, 0.0
    %783 = vadd.xlane.f32.xlu0 %v782
    %v784 = vpop.xlane.xlu0 %783
    %v785 = vsel %vm46, %v779, 0.0
    %786 = vadd.xlane.f32.xlu0 %v785
    %v787 = vpop.xlane.xlu0 %786
    %v788 = vrot.slane %v784, 4
    %v789 = vmax.f32 %v784, %v788
    %v790 = vrot.slane %v789, 2
    %v791 = vmax.f32 %v789, %v790
    %v792 = vrot.slane %v791, 1
    %v793 = vmax.f32 %v791, %v792
    %v794 = vrot.slane %v787, 4
    %v795 = vmax.f32 %v787, %v794
    %v796 = vrot.slane %v795, 2
    %v797 = vmax.f32 %v795, %v796
    %v798 = vrot.slane %v797, 1
    %v799 = vmax.f32 %v797, %v798
    %v800 = vsub.f32 %v784, %v793
    %v801 = vsub.f32 %v787, %v799
    %v802 = vmul.f32 %v800, 1.442695
    %v803 = vpow.pop %v802
    %v804 = vmul.f32 %v801, 1.442695
    %v805 = vpow.pop %v804
    %v806 = vmul.f32 %v803, %v39
    %v807 = vmul.f32 %v805, %v40
    %v808 = vrot.slane %v806, 4
    %v809 = vadd.f32 %v806, %v808
    %v810 = vrot.slane %v809, 2
    %v811 = vadd.f32 %v809, %v810
    %v812 = vrot.slane %v811, 1
    %v813 = vadd.f32 %v811, %v812
    %v814 = vrot.slane %v807, 4
    %v815 = vadd.f32 %v807, %v814
    %v816 = vrot.slane %v815, 2
    %v817 = vadd.f32 %v815, %v816
    %v818 = vrot.slane %v817, 1
    %v819 = vadd.f32 %v817, %v818
    %vm820 = vcmp.lt.s32.totalorder %v626, 40
    %v823 = vsel %vm403, %v819, %v813
    %v825 = vsel %vm820, %v823, 1.0
    %v826 = vlog2.pop %v825
    %v827 = vmul.f32 %v826, 0.6931472
    %v830 = vsel %vm403, %v799, %v793
    %v832 = vadd.f32 %v827, %v830
    %v833 = vsel %vm820, %v832, -1e+30
    %vm834 = vcmask 1041408
    %v835 = vsel %vm834, %v723, -inf
    %836 = vmax.xlane.f32.xlu0 %v835
    %v837 = vpop.xlane.xlu0 %836
    %v838 = vsel %vm834, %v833, -inf
    %839 = vmax.xlane.f32.xlu0 %v838
    %v840 = vpop.xlane.xlu0 %839
    %v841 = vmax.f32 %v837, %v840
    %v842 = vsub.f32 %v723, %v841
    %v843 = vmul.f32 %v842, 1.442695
    %v844 = vpow.pop %v843
    %v845 = vsub.f32 %v833, %v841
    %v846 = vmul.f32 %v845, 1.442695
    %v847 = vpow.pop %v846
    %v848 = vsel %vm834, %v844, 0.0
    %849 = vadd.xlane.f32.xlu0 %v848
    %v850 = vpop.xlane.xlu0 %849
    %v851 = vsel %vm834, %v847, 0.0
    %852 = vadd.xlane.f32.xlu0 %v851
    %v853 = vpop.xlane.xlu0 %852
    %v854 = vadd.f32 %v850, %v853
    %v855 = vrcp.pop %v854
    %v856 = vmul.f32 1.0, %v855
    %v857 = vadd.f32 %v844, %v847
    %v858 = vmul.f32 %v857, %v856
    %859 = vst [vmem:[#allocation5] sm:$0x3] %v858
    // Predicated region
    $region22: #{response_decoder_forward.1} parent=1 // pred_check
      _
    $region23: #{response_decoder_forward.1} parent=1 // pred_check_branch
      %861 = sbr.rel (0) target = $region25
    $region24: #{response_decoder_forward.1} parent=1 // pred_region
      %s863 = ssub.s32 32, 32
      %864 = vsyncadd [#allocation4], %s863
      %s866 = sshll.u32 [#allocation5], 4
      %s867 = int_to_ptr.vmem [resolvable:$true] %s866
      %869 = dma.vmem_to_hbm [thread:$0]  %s867, 32, %s4, [#allocation4]
    $region25: #{response_decoder_forward.1} parent=1 // pred_fallthru
      _
    // Predicated region
    $region26: #{response_decoder_forward.1} parent=1 // pred_check
      _
    $region27: #{response_decoder_forward.1} parent=1 // pred_check_branch
      %871 = sbr.rel (0) target = $region29
    $region28: #{response_decoder_forward.1} parent=1 // pred_region
      _
    $region29: #{response_decoder_forward.1} parent=1 // pred_fallthru
      _
    // Predicated region
    $region30: #{response_decoder_forward.1} parent=1 // pred_check
      _
    $region31: #{response_decoder_forward.1} parent=1 // pred_check_branch
      %873 = sbr.rel (0) target = $region33
    $region32: #{response_decoder_forward.1} parent=1 // pred_region
      %874 = dma.done [#allocation4], 32
    $region33: #{response_decoder_forward.1} parent=1 // pred_fallthru
      _
    // Predicated region
    $region34: #{response_decoder_forward.1} parent=1 // pred_check
      _
    $region35: #{response_decoder_forward.1} parent=1 // pred_check_branch
      %876 = sbr.rel (0) target = $region37
    $region36: #{response_decoder_forward.1} parent=1 // pred_region
      _
    $region37: #{response_decoder_forward.1} parent=1 // pred_fallthru
      _
    %877 = vsyncpa [#allocation3], 1
    %878 = vsyncpa [#allocation4], 1

</llo_original>
